<compile_context>
chip_gen: v5e
topology: v5e:2x2
jax: 0.10.0
libtpu: 0.0.40
codegen_flags: <defaults>
</compile_context>

<pallas_src>
import functools

import jax
import jax.numpy as jnp
from jax import lax
from jax.experimental import pallas as pl
from jax.experimental.pallas import tpu as pltpu


def _round_up(x: int, m: int) -> int:
    return (x + m - 1) // m * m


def _gelu_exact(x):
    # torch.nn.GELU() default is the exact erf form; keep the math in f32.
    return 0.5 * x * (1.0 + lax.erf(x * (1.0 / jnp.sqrt(2.0).astype(x.dtype))))


def mlp_block_kernel(x_ref, w1_ref, b1_ref, w2_ref, b2_ref, o_ref):
    # x_ref:  (tm, E_pad)     w1_ref: (E_pad, H_pad)   b1_ref: (1, H_pad)
    # w2_ref: (H_pad, E_pad)  b2_ref: (1, E_pad)       o_ref:  (tm, E_pad)
    # First matmul: operands in their storage dtype (f32 or bf16), f32 accumulate.
    h = jnp.dot(x_ref[...], w1_ref[...], preferred_element_type=jnp.float32)
    h = h + b1_ref[...].astype(jnp.float32)
    h = _gelu_exact(h)                      # exact erf GELU, f32 on VPU/EUP
    # TODO(synk): nn.Dropout skipped — identity in eval mode (no RNG mask).
    y = jnp.dot(h.astype(w2_ref.dtype), w2_ref[...],
                preferred_element_type=jnp.float32)
    y = y + b2_ref[...].astype(jnp.float32)
    o_ref[...] = y.astype(o_ref.dtype)


def mlp_block(x, w1, b1, w2, b2, *, tm=128, compute_dtype=None):
    """MLP block forward.

    x:  [N, E] float32        w1: [E, H]   b1: [H]
    w2: [H, E]                b2: [E]
    compute_dtype: optional narrow dtype (e.g. jnp.bfloat16) for the MXU
        operands on v6e/v7x; accumulation / GELU / bias stay f32.
    """
    N, E = x.shape
    H = w1.shape[1]
    out_dtype = x.dtype

    # --- Lane-dense padding: last dims padded to multiples of 128. ----------
    E_pad = _round_up(E, 128)
    H_pad = _round_up(H, 128)

    # --- Row tile: MXU-aligned, but never larger than the (8-aligned) N. ----
    tm_eff = min(_round_up(tm, 8), _round_up(N, 8))
    N_pad = _round_up(N, tm_eff)
    grid = (N_pad // tm_eff,)

    cdt = compute_dtype if compute_dtype is not None else x.dtype

    x_p = jnp.pad(x, ((0, N_pad - N), (0, E_pad - E))).astype(cdt)
    w1_p = jnp.pad(w1, ((0, E_pad - E), (0, H_pad - H))).astype(cdt)
    w2_p = jnp.pad(w2, ((0, H_pad - H), (0, E_pad - E))).astype(cdt)
    b1_p = jnp.pad(b1, (0, H_pad - H)).reshape(1, H_pad).astype(jnp.float32)
    b2_p = jnp.pad(b2, (0, E_pad - E)).reshape(1, E_pad).astype(jnp.float32)

    # --- VMEM budget (double-buffered tiles + resident weights) -------------
    isz = jnp.dtype(cdt).itemsize
    osz = jnp.dtype(out_dtype).itemsize
    vmem_est = (
        2 * tm_eff * E_pad * isz            # x tile (double-buffered)
        + 2 * tm_eff * E_pad * osz          # out tile (double-buffered)
        + 2 * (E_pad * H_pad + H_pad * E_pad) * isz   # W1 + W2
        + 2 * (H_pad + E_pad) * 4           # biases
        + 2 * tm_eff * H_pad * 4            # hidden activation headroom
    )
    vmem_limit = min(48 << 20, max(2 * vmem_est, 16 << 20))

    out_p = pl.pallas_call(
        mlp_block_kernel,
        out_shape=jax.ShapeDtypeStruct((N_pad, E_pad), out_dtype),
        grid_spec=pltpu.PrefetchScalarGridSpec(
            num_scalar_prefetch=0,
            grid=grid,
            in_specs=[
                pl.BlockSpec((tm_eff, E_pad), lambda i: (i, 0)),  # x row tile
                # Constant-index weights stay VMEM-resident across all steps.
                # (At large E/H: pipeline_mode=pl.Buffered(1) to single-buffer.)
                pl.BlockSpec((E_pad, H_pad), lambda i: (0, 0)),   # W1
                pl.BlockSpec((1, H_pad), lambda i: (0, 0)),       # b1
                pl.BlockSpec((H_pad, E_pad), lambda i: (0, 0)),   # W2
                pl.BlockSpec((1, E_pad), lambda i: (0, 0)),       # b2
            ],
            out_specs=pl.BlockSpec((tm_eff, E_pad), lambda i: (i, 0)),
        ),
        compiler_params=pltpu.CompilerParams(
            dimension_semantics=("parallel",),
            vmem_limit_bytes=int(vmem_limit),
        ),
    )(x_p, w1_p, b1_p, w2_p, b2_p)

    # Strip the padding back off.
    return out_p[:N, :E]


def mlp_block_ref(x, w1, b1, w2, b2):
    h = x @ w1 + b1
    h = _gelu_exact(h)
    return h @ w2 + b2


if __name__ == "__main__":
    # Module hyperparameters (small, consistent with the forward pass).
    batch, seq, emb_dim, expansion = 2, 8, 32, 4
    hidden = expansion * emb_dim  # 128

    key = jax.random.PRNGKey(0)
    kx, k1, kb1, k2, kb2 = jax.random.split(key, 5)

    # Input: [batch, seq, emb_dim] — typical transformer token layout.
    x = jax.random.normal(kx, (batch, seq, emb_dim), dtype=jnp.float32)

    # Deterministic parameter init.
    w1 = jax.random.normal(k1, (emb_dim, hidden), dtype=jnp.float32) * 0.02
    b1 = jax.random.uniform(kb1, (hidden,), dtype=jnp.float32, minval=-0.01, maxval=0.01)
    w2 = jax.random.normal(k2, (hidden, emb_dim), dtype=jnp.float32) * 0.02
    b2 = jax.random.uniform(kb2, (emb_dim,), dtype=jnp.float32, minval=-0.01, maxval=0.01)

    x2d = x.reshape(batch * seq, emb_dim)

    out2d = mlp_block(x2d, w1, b1, w2, b2, tm=128)
    out = out2d.reshape(batch, seq, emb_dim)
    jax.block_until_ready(out)

    # Correctness check against pure-JAX reference.
    ref = mlp_block_ref(x2d, w1, b1, w2, b2).reshape(batch, seq, emb_dim)
    assert jnp.allclose(out, ref, atol=1e-5, rtol=1e-5), "mismatch vs reference"

    print("KERNEL_OK")
</pallas_src>

<mosaic_0001>
module attributes {stable_mosaic.version = 11 : i64} {
  func.func @mlp_block_kernel(%arg0: i32, %arg1: memref<16x128xf32, #tpu.memory_space<vmem>>, %arg2: memref<128x128xf32, #tpu.memory_space<vmem>>, %arg3: memref<1x128xf32, #tpu.memory_space<vmem>>, %arg4: memref<128x128xf32, #tpu.memory_space<vmem>>, %arg5: memref<1x128xf32, #tpu.memory_space<vmem>>, %arg6: memref<16x128xf32, #tpu.memory_space<vmem>>) attributes {dimension_semantics = [#tpu.dimension_semantics<parallel>], iteration_bounds = array<i64: 1>, scalar_prefetch = 0 : i64, scratch_operands = 0 : i64, tpu.core_type = #tpu.core_type<tc>, window_params = [{transform_indices = @transform_0, window_bounds = array<i64: 16, 128>}, {pipeline_mode = #tpu.pipeline_mode<synchronous>, transform_indices = @transform_1, window_bounds = array<i64: 128, 128>}, {pipeline_mode = #tpu.pipeline_mode<synchronous>, transform_indices = @transform_2, window_bounds = array<i64: 1, 128>}, {pipeline_mode = #tpu.pipeline_mode<synchronous>, transform_indices = @transform_3, window_bounds = array<i64: 128, 128>}, {pipeline_mode = #tpu.pipeline_mode<synchronous>, transform_indices = @transform_4, window_bounds = array<i64: 1, 128>}, {transform_indices = @transform_5, window_bounds = array<i64: 16, 128>}]} {
    %c0 = arith.constant 0 : index
    %c0_0 = arith.constant 0 : index
    %0 = vector.load %arg1[%c0, %c0_0] : memref<16x128xf32, #tpu.memory_space<vmem>>, vector<16x128xf32>
    %c0_1 = arith.constant 0 : index
    %c0_2 = arith.constant 0 : index
    %1 = vector.load %arg2[%c0_1, %c0_2] : memref<128x128xf32, #tpu.memory_space<vmem>>, vector<128x128xf32>
    %cst = arith.constant dense<0.000000e+00> : vector<16x128xf32>
    %2 = tpu.matmul %0, %1, %cst {dimension_numbers = #tpu.dot_dimension_numbers<[1], [0], [0], [1], [0, 0, 1, 1], [], []>} : vector<16x128xf32>, vector<128x128xf32>, vector<16x128xf32> -> vector<16x128xf32>
    %c0_3 = arith.constant 0 : index
    %c0_4 = arith.constant 0 : index
    %3 = vector.load %arg3[%c0_3, %c0_4] : memref<1x128xf32, #tpu.memory_space<vmem>>, vector<1x128xf32>
    %4 = vector.broadcast %3 : vector<1x128xf32> to vector<16x128xf32>
    %5 = arith.addf %2, %4 : vector<16x128xf32>
    %cst_5 = arith.constant 5.000000e-01 : f32
    %6 = vector.broadcast %cst_5 : f32 to vector<16x128xf32>
    %7 = arith.mulf %6, %5 : vector<16x128xf32>
    %cst_6 = arith.constant 2.000000e+00 : f32
    %8 = math.sqrt %cst_6 : f32
    %cst_7 = arith.constant 1.000000e+00 : f32
    %9 = arith.divf %cst_7, %8 : f32
    %10 = vector.broadcast %9 : f32 to vector<16x128xf32>
    %11 = arith.mulf %5, %10 : vector<16x128xf32>
    %12 = math.erf %11 : vector<16x128xf32>
    %cst_8 = arith.constant 1.000000e+00 : f32
    %13 = vector.broadcast %cst_8 : f32 to vector<16x128xf32>
    %14 = arith.addf %13, %12 : vector<16x128xf32>
    %15 = arith.mulf %7, %14 : vector<16x128xf32>
    %c0_9 = arith.constant 0 : index
    %c0_10 = arith.constant 0 : index
    %16 = vector.load %arg4[%c0_9, %c0_10] : memref<128x128xf32, #tpu.memory_space<vmem>>, vector<128x128xf32>
    %cst_11 = arith.constant dense<0.000000e+00> : vector<16x128xf32>
    %17 = tpu.matmul %15, %16, %cst_11 {dimension_numbers = #tpu.dot_dimension_numbers<[1], [0], [0], [1], [0, 0, 1, 1], [], []>} : vector<16x128xf32>, vector<128x128xf32>, vector<16x128xf32> -> vector<16x128xf32>
    %c0_12 = arith.constant 0 : index
    %c0_13 = arith.constant 0 : index
    %18 = vector.load %arg5[%c0_12, %c0_13] : memref<1x128xf32, #tpu.memory_space<vmem>>, vector<1x128xf32>
    %19 = vector.broadcast %18 : vector<1x128xf32> to vector<16x128xf32>
    %20 = arith.addf %17, %19 : vector<16x128xf32>
    %c0_14 = arith.constant 0 : index
    %c0_15 = arith.constant 0 : index
    %21 = vector.load %arg6[%c0_14, %c0_15] : memref<16x128xf32, #tpu.memory_space<vmem>>, vector<16x128xf32>
    tpu.vector_store %arg6[%c0_14, %c0_15], %20 {strides = array<i32>} : memref<16x128xf32, #tpu.memory_space<vmem>>, vector<16x128xf32>,
    return
  }
  func.func @transform_0(%arg0: i32) -> (i32, i32) {
    %c0_i32 = arith.constant 0 : i32
    %c0_i32_0 = arith.constant 0 : i32
    return %arg0, %c0_i32 : i32, i32
  }
  func.func @transform_1(%arg0: i32) -> (i32, i32) {
    %c0_i32 = arith.constant 0 : i32
    %c0_i32_0 = arith.constant 0 : i32
    %c0_i32_1 = arith.constant 0 : i32
    return %c0_i32, %c0_i32_0 : i32, i32
  }
  func.func @transform_2(%arg0: i32) -> (i32, i32) {
    %c0_i32 = arith.constant 0 : i32
    %c0_i32_0 = arith.constant 0 : i32
    %c0_i32_1 = arith.constant 0 : i32
    return %c0_i32, %c0_i32_0 : i32, i32
  }
  func.func @transform_3(%arg0: i32) -> (i32, i32) {
    %c0_i32 = arith.constant 0 : i32
    %c0_i32_0 = arith.constant 0 : i32
    %c0_i32_1 = arith.constant 0 : i32
    return %c0_i32, %c0_i32_0 : i32, i32
  }
  func.func @transform_4(%arg0: i32) -> (i32, i32) {
    %c0_i32 = arith.constant 0 : i32
    %c0_i32_0 = arith.constant 0 : i32
    %c0_i32_1 = arith.constant 0 : i32
    return %c0_i32, %c0_i32_0 : i32, i32
  }
  func.func @transform_5(%arg0: i32) -> (i32, i32) {
    %c0_i32 = arith.constant 0 : i32
    %c0_i32_0 = arith.constant 0 : i32
    return %arg0, %c0_i32 : i32, i32
  }
}

</mosaic_0001>

<llo_original>
// kernel: tpu_custom_call.1
$region0: #{tpu_custom_call.1}
  #allocation0 [shape = 'u32[]', space=smem, size = 0x4, offset = 0x4, fixed_abs, tag = 'smem constant byte address 0x4 - core index']
  #allocation1 [shape = 'u32[72,128]{1,0:T(1,128)}', space=vmem, size = 0x9000, scoped, tag = 'internal scratch']
  %s0 = inlined_call_operand.hbm [shape: f32[16,128], index: 0, kind: input, shape index: {}]
  %s1 = inlined_call_operand.hbm [shape: f32[128,128], index: 1, kind: input, shape index: {}]
  %s2 = inlined_call_operand.vmem [shape: f32[1,128], index: 2, kind: input, shape index: {}]
  %s3 = inlined_call_operand.hbm [shape: f32[128,128], index: 3, kind: input, shape index: {}]
  %s4 = inlined_call_operand.vmem [shape: f32[1,128], index: 4, kind: input, shape index: {}]
  %s5 = inlined_call_operand.hbm [shape: f32[16,128], index: 5, kind: output, shape index: {}]
  %s6 = sld [smem:[#allocation0]]
  $region42: #{tpu_custom_call.1} parent=0
    _
  %s8 = ssub.s32 1, %s6
  %s9 = scalar_select 0, %s8, %s6
  $region1: #{tpu_custom_call.1} parent=0
    #allocation2 [shape = 'u8[8192]{0}', space=vmem, size = 0x2000, scoped, tag = 'input window, operand 0, single buffered']
    #allocation3 [shape = 's32[1]{0}', space=sflag, size = 0x4, scoped, tag = 'scoped memory for tpu_custom_call.1']
    #allocation4 [shape = 's32[1]{0}', space=sflag, size = 0x4, scoped, tag = 'scoped memory for tpu_custom_call.1']
    #allocation5 [shape = 'u8[65536]{0}', space=vmem, size = 0x10000, scoped, tag = 'input window, operand 1, single buffered']
    #allocation6 [shape = 's32[1]{0}', space=sflag, size = 0x4, scoped, tag = 'scoped memory for tpu_custom_call.1']
    #allocation7 [shape = 'u8[65536]{0}', space=vmem, size = 0x10000, scoped, tag = 'input window, operand 3, single buffered']
    #allocation8 [shape = 'u8[8192]{0}', space=vmem, size = 0x2000, scoped, tag = 'output window, operand 0, single buffered']
    %10 = vsyncpa [#allocation3], 0
    %11 = vsyncpa [#allocation6], 0
    %12 = vsyncpa [#allocation4], 0
    // Predicated region
    $region2: #{tpu_custom_call.1} parent=1 // pred_check
      _
    $region3: #{tpu_custom_call.1} parent=1 // pred_check_branch
      %14 = sbr.rel (0) target = $region5
    $region4: #{tpu_custom_call.1} parent=1 // pred_region
      %16 = vsyncadd [#allocation3], 0
      %s17 = sshll.u32 %s0, 4
      %s18 = int_to_ptr.hbm [resolvable:$true] %s17
      %s19 = sshll.u32 [#allocation2], 4
      %s20 = int_to_ptr.vmem [resolvable:$true] %s19
      %25 = dma.hbm_to_vmem [thread:$0]  %s18, 256, %s20, [#allocation3], 128, 128, 8
    $region5: #{tpu_custom_call.1} parent=1 // pred_fallthru
      _
    // Predicated region
    $region6: #{tpu_custom_call.1} parent=1 // pred_check
      _
    $region7: #{tpu_custom_call.1} parent=1 // pred_check_branch
      %27 = sbr.rel (0) target = $region9
    $region8: #{tpu_custom_call.1} parent=1 // pred_region
      %29 = vsyncadd [#allocation6], 0
      %s30 = sshll.u32 %s1, 4
      %s31 = int_to_ptr.hbm [resolvable:$true] %s30
      %s32 = sshll.u32 [#allocation5], 4
      %s33 = int_to_ptr.vmem [resolvable:$true] %s32
      %38 = dma.hbm_to_vmem [thread:$0]  %s31, 2048, %s33, [#allocation6], 128, 128, 8
    $region9: #{tpu_custom_call.1} parent=1 // pred_fallthru
      _
    // Predicated region
    $region10: #{tpu_custom_call.1} parent=1 // pred_check
      _
    $region11: #{tpu_custom_call.1} parent=1 // pred_check_branch
      %40 = sbr.rel (0) target = $region13
    $region12: #{tpu_custom_call.1} parent=1 // pred_region
      _
    $region13: #{tpu_custom_call.1} parent=1 // pred_fallthru
      _
    // Predicated region
    $region14: #{tpu_custom_call.1} parent=1 // pred_check
      _
    $region15: #{tpu_custom_call.1} parent=1 // pred_check_branch
      %42 = sbr.rel (0) target = $region17
    $region16: #{tpu_custom_call.1} parent=1 // pred_region
      %44 = vsyncadd [#allocation6], 0
      %s45 = sshll.u32 %s3, 4
      %s46 = int_to_ptr.hbm [resolvable:$true] %s45
      %s47 = sshll.u32 [#allocation7], 4
      %s48 = int_to_ptr.vmem [resolvable:$true] %s47
      %53 = dma.hbm_to_vmem [thread:$0]  %s46, 2048, %s48, [#allocation6], 128, 128, 8
    $region17: #{tpu_custom_call.1} parent=1 // pred_fallthru
      _
    // Predicated region
    $region18: #{tpu_custom_call.1} parent=1 // pred_check
      _
    $region19: #{tpu_custom_call.1} parent=1 // pred_check_branch
      %55 = sbr.rel (0) target = $region21
    $region20: #{tpu_custom_call.1} parent=1 // pred_region
      _
    $region21: #{tpu_custom_call.1} parent=1 // pred_fallthru
      _
    // Predicated region
    $region22: #{tpu_custom_call.1} parent=1 // pred_check
      _
    $region23: #{tpu_custom_call.1} parent=1 // pred_check_branch
      %57 = sbr.rel (0) target = $region25
    $region24: #{tpu_custom_call.1} parent=1 // pred_region
      %59 = dma.done [#allocation3], 256
    $region25: #{tpu_custom_call.1} parent=1 // pred_fallthru
      _
    // Predicated region
    $region26: #{tpu_custom_call.1} parent=1 // pred_check
      _
    $region27: #{tpu_custom_call.1} parent=1 // pred_check_branch
      %61 = sbr.rel (0) target = $region29
    $region28: #{tpu_custom_call.1} parent=1 // pred_region
      %63 = dma.done [#allocation6], 2048
    $region29: #{tpu_custom_call.1} parent=1 // pred_fallthru
      _
    // Predicated region
    $region30: #{tpu_custom_call.1} parent=1 // pred_check
      _
    $region31: #{tpu_custom_call.1} parent=1 // pred_check_branch
      %65 = sbr.rel (0) target = $region33
    $region32: #{tpu_custom_call.1} parent=1 // pred_region
      %67 = dma.done [#allocation6], 2048
    $region33: #{tpu_custom_call.1} parent=1 // pred_fallthru
      _
    %v68 = vld [vmem:[#allocation2] sm:$0xff]
    %v69 = vld [vmem:[#allocation2 + $0x8] sm:$0xff]
    %v70 = vld [vmem:[#allocation5] sm:$0xff]
    %v71 = vld [vmem:[#allocation5 + $0x8] sm:$0xff]
    %v72 = vld [vmem:[#allocation5 + $0x10] sm:$0xff]
    %v73 = vld [vmem:[#allocation5 + $0x18] sm:$0xff]
    %v74 = vld [vmem:[#allocation5 + $0x20] sm:$0xff]
    %v75 = vld [vmem:[#allocation5 + $0x28] sm:$0xff]
    %v76 = vld [vmem:[#allocation5 + $0x30] sm:$0xff]
    %v77 = vld [vmem:[#allocation5 + $0x38] sm:$0xff]
    %v78 = vld [vmem:[#allocation5 + $0x40] sm:$0xff]
    %v79 = vld [vmem:[#allocation5 + $0x48] sm:$0xff]
    %v80 = vld [vmem:[#allocation5 + $0x50] sm:$0xff]
    %v81 = vld [vmem:[#allocation5 + $0x58] sm:$0xff]
    %v82 = vld [vmem:[#allocation5 + $0x60] sm:$0xff]
    %v83 = vld [vmem:[#allocation5 + $0x68] sm:$0xff]
    %v84 = vld [vmem:[#allocation5 + $0x70] sm:$0xff]
    %v85 = vld [vmem:[#allocation5 + $0x78] sm:$0xff]
    %v86 = vld [vmem:[%s2] sm:$0x1]
    %v88 = vperm.slane %v86, 0
    %90 = vmatpush.msra.mxu0 %v85
    %91 = vmatpush.msra.mxu0 %v84
    %92 = vmatpush.msra.mxu0 %v83
    %93 = vmatpush.msra.mxu0 %v82
    %94 = vmatpush.msra.mxu0 %v81
    %95 = vmatpush.msra.mxu0 %v80
    %96 = vmatpush.msra.mxu0 %v79
    %97 = vmatpush.msra.mxu0 %v78
    %98 = vmatpush.msra.mxu0 %v77
    %99 = vmatpush.msra.mxu0 %v76
    %100 = vmatpush.msra.mxu0 %v75
    %101 = vmatpush.msra.mxu0 %v74
    %102 = vmatpush.msra.mxu0 %v73
    %103 = vmatpush.msra.mxu0 %v72
    %104 = vmatpush.msra.mxu0 %v71
    %105 = vmatpush.msra.mxu0 %v70
    %106 = vmatmul.f32.gmra.mxu0 %v68
    %v107 = vpop.f32.mrf.mxu0
    %v108 = vadd.f32 %v88, %v107
    %109 = vmatmul.f32.gmra.mxu0 %v69
    %v110 = vpop.f32.mrf.mxu0
    %v111 = vadd.f32 %v88, %v110
    %112 = vdwg.mxu0
    %v113 = vmul.f32 %v108, 0.5
    %v114 = vmul.f32 %v111, 0.5
    %v115 = vmul.f32 %v108, 0.70710677
    %v116 = vmul.f32 %v111, 0.70710677
    %v117 = vmul.f32 %v115, %v115
    %v118 = vmin.f32 16.0, %v117
    %v119 = vmul.f32 %v118, 2.1237322e-06
    %v120 = vadd.f32 %v119, 0.00028619796
    %v121 = vmul.f32 %v118, %v120
    %v122 = vadd.f32 %v121, 0.0036580483
    %v123 = vmul.f32 %v118, %v122
    %v124 = vadd.f32 %v123, 0.05243302
    %v125 = vmul.f32 %v118, %v124
    %v126 = vadd.f32 %v125, 0.18741608
    %v127 = vmul.f32 %v118, %v126
    %v128 = vadd.f32 %v127, 1.1283791
    %v129 = vmul.f32 %v115, %v128
    %v130 = vmul.f32 %v118, 3.8918573e-05
    %v131 = vadd.f32 %v130, 0.001143296
    %v132 = vmul.f32 %v118, %v131
    %v133 = vadd.f32 %v132, 0.014752088
    %v134 = vmul.f32 %v118, %v133
    %v135 = vadd.f32 %v134, 0.112945676
    %v136 = vmul.f32 %v118, %v135
    %v137 = vadd.f32 %v136, 0.4994258
    %v138 = vmul.f32 %v118, %v137
    %v139 = vadd.f32 %v138, 1.0
    %v140 = vrcp.pop %v139
    %v141 = vmul.f32 %v139, %v140
    %v142 = vsub.f32 1.0, %v141
    %v143 = vmul.f32 %v140, %v142
    %v144 = vadd.f32 %v140, %v143
    %vm145 = vweird.f32 %v139
    %vm146 = vweird.f32 %v140
    %vm147 = vmor %vm145, %vm146
    %v148 = vsel %vm147, %v140, %v144
    %v149 = vand.u32 2147483647, %v139
    %vm150 = vcmp.eq.f32.partialorder %v149, 8.507059e+37
    %v151 = vand.u32 %v139, 2147483648
    %v152 = vor.u32 1.1754944e-38, %v151
    %v153 = vsel %vm150, %v152, %v148
    %v154 = vmul.f32 %v129, %v153
    %v155 = vmin.f32 %v154, 1.0
    %v156 = vmax.f32 %v155, -1.0
    %v157 = vmul.f32 %v116, %v116
    %v158 = vmin.f32 16.0, %v157
    %v159 = vmul.f32 %v158, 2.1237322e-06
    %v160 = vadd.f32 %v159, 0.00028619796
    %v161 = vmul.f32 %v158, %v160
    %v162 = vadd.f32 %v161, 0.0036580483
    %v163 = vmul.f32 %v158, %v162
    %v164 = vadd.f32 %v163, 0.05243302
    %v165 = vmul.f32 %v158, %v164
    %v166 = vadd.f32 %v165, 0.18741608
    %v167 = vmul.f32 %v158, %v166
    %v168 = vadd.f32 %v167, 1.1283791
    %v169 = vmul.f32 %v116, %v168
    %v170 = vmul.f32 %v158, 3.8918573e-05
    %v171 = vadd.f32 %v170, 0.001143296
    %v172 = vmul.f32 %v158, %v171
    %v173 = vadd.f32 %v172, 0.014752088
    %v174 = vmul.f32 %v158, %v173
    %v175 = vadd.f32 %v174, 0.112945676
    %v176 = vmul.f32 %v158, %v175
    %v177 = vadd.f32 %v176, 0.4994258
    %v178 = vmul.f32 %v158, %v177
    %v179 = vadd.f32 %v178, 1.0
    %v180 = vrcp.pop %v179
    %v181 = vmul.f32 %v179, %v180
    %v182 = vsub.f32 1.0, %v181
    %v183 = vmul.f32 %v180, %v182
    %v184 = vadd.f32 %v180, %v183
    %vm185 = vweird.f32 %v179
    %vm186 = vweird.f32 %v180
    %vm187 = vmor %vm185, %vm186
    %v188 = vsel %vm187, %v180, %v184
    %v189 = vand.u32 2147483647, %v179
    %vm190 = vcmp.eq.f32.partialorder %v189, 8.507059e+37
    %v191 = vand.u32 %v179, 2147483648
    %v192 = vor.u32 1.1754944e-38, %v191
    %v193 = vsel %vm190, %v192, %v188
    %v194 = vmul.f32 %v169, %v193
    %v195 = vmin.f32 %v194, 1.0
    %v196 = vmax.f32 %v195, -1.0
    %v197 = vadd.f32 %v156, 1.0
    %v198 = vadd.f32 %v196, 1.0
    %v199 = vmul.f32 %v113, %v197
    %v200 = vmul.f32 %v114, %v198
    %v201 = vld [vmem:[#allocation7] sm:$0xff]
    %v202 = vld [vmem:[#allocation7 + $0x8] sm:$0xff]
    %v203 = vld [vmem:[#allocation7 + $0x10] sm:$0xff]
    %v204 = vld [vmem:[#allocation7 + $0x18] sm:$0xff]
    %v205 = vld [vmem:[#allocation7 + $0x20] sm:$0xff]
    %v206 = vld [vmem:[#allocation7 + $0x28] sm:$0xff]
    %v207 = vld [vmem:[#allocation7 + $0x30] sm:$0xff]
    %v208 = vld [vmem:[#allocation7 + $0x38] sm:$0xff]
    %v209 = vld [vmem:[#allocation7 + $0x40] sm:$0xff]
    %v210 = vld [vmem:[#allocation7 + $0x48] sm:$0xff]
    %v211 = vld [vmem:[#allocation7 + $0x50] sm:$0xff]
    %v212 = vld [vmem:[#allocation7 + $0x58] sm:$0xff]
    %v213 = vld [vmem:[#allocation7 + $0x60] sm:$0xff]
    %v214 = vld [vmem:[#allocation7 + $0x68] sm:$0xff]
    %v215 = vld [vmem:[#allocation7 + $0x70] sm:$0xff]
    %v216 = vld [vmem:[#allocation7 + $0x78] sm:$0xff]
    %v217 = vld [vmem:[%s4] sm:$0x1]
    %v219 = vperm.slane %v217, 0
    %221 = vmatpush.msra.mxu0 %v216
    %222 = vmatpush.msra.mxu0 %v215
    %223 = vmatpush.msra.mxu0 %v214
    %224 = vmatpush.msra.mxu0 %v213
    %225 = vmatpush.msra.mxu0 %v212
    %226 = vmatpush.msra.mxu0 %v211
    %227 = vmatpush.msra.mxu0 %v210
    %228 = vmatpush.msra.mxu0 %v209
    %229 = vmatpush.msra.mxu0 %v208
    %230 = vmatpush.msra.mxu0 %v207
    %231 = vmatpush.msra.mxu0 %v206
    %232 = vmatpush.msra.mxu0 %v205
    %233 = vmatpush.msra.mxu0 %v204
    %234 = vmatpush.msra.mxu0 %v203
    %235 = vmatpush.msra.mxu0 %v202
    %236 = vmatpush.msra.mxu0 %v201
    %237 = vmatmul.f32.gmra.mxu0 %v199
    %v238 = vpop.f32.mrf.mxu0
    %v239 = vadd.f32 %v219, %v238
    %240 = vmatmul.f32.gmra.mxu0 %v200
    %v241 = vpop.f32.mrf.mxu0
    %v242 = vadd.f32 %v219, %v241
    %243 = vdwg.mxu0
    %244 = vst [vmem:[#allocation8] sm:$0xff] %v239
    %245 = vst [vmem:[#allocation8 + $0x8] sm:$0xff] %v242
    // Predicated region
    $region34: #{tpu_custom_call.1} parent=1 // pred_check
      _
    $region35: #{tpu_custom_call.1} parent=1 // pred_check_branch
      %247 = sbr.rel (0) target = $region37
    $region36: #{tpu_custom_call.1} parent=1 // pred_region
      %249 = vsyncadd [#allocation4], 0
      %s250 = sshll.u32 [#allocation8], 4
      %s251 = int_to_ptr.vmem [resolvable:$true] %s250
      %s252 = sshll.u32 %s5, 4
      %s253 = int_to_ptr.hbm [resolvable:$true] %s252
      %258 = dma.vmem_to_hbm [thread:$0]  %s251, 256, %s253, [#allocation4], 128, 128, 8
    $region37: #{tpu_custom_call.1} parent=1 // pred_fallthru
      _
    // Predicated region
    $region38: #{tpu_custom_call.1} parent=1 // pred_check
      _
    $region39: #{tpu_custom_call.1} parent=1 // pred_check_branch
      %260 = sbr.rel (0) target = $region41
    $region40: #{tpu_custom_call.1} parent=1 // pred_region
      %262 = dma.done [#allocation4], 256
    $region41: #{tpu_custom_call.1} parent=1 // pred_fallthru
      _
    %263 = vsyncpa [#allocation3], 1
    %264 = vsyncpa [#allocation6], 1
    %265 = vsyncpa [#allocation4], 1

</llo_original>
